<compile_context>
chip_gen: v5e
topology: v5e:2x2
jax: 0.10.0
libtpu: 0.0.40
codegen_flags: <defaults>
</compile_context>

<pallas_src>
import jax
import jax.numpy as jnp
from jax.experimental import pallas as pl
from jax.experimental.pallas import tpu as pltpu


def _round_up(x, m):
    return (x + m - 1) // m * m


def mlp_classifier_kernel(ids_ref, inv_den_ref, emb_ref, w1_ref, b1_ref,
                          w2_ref, b2_ref, out_ref):
    ids = ids_ref[...]                     # (TB, S) int32, padded positions == 0
    inv_den = inv_den_ref[...]             # (TB, 1)  f32, 1 / sum(mask)

    tb, s_len = ids.shape
    v = emb_ref.shape[0]

    # Fused gather + masked-sum pool:
    #   counts[b, v] = #{s : ids[b, s] == v}
    #   pooled_sum   = counts @ table        (MXU, f32 accumulate)
    # Padded positions carry id 0 whose embedding row is zero, so they
    # contribute nothing (matches (embeds * mask).sum(1) exactly).
    vocab_iota = jax.lax.broadcasted_iota(jnp.int32, (tb, v), 1)   # (TB, V)
    counts = jnp.zeros((tb, v), jnp.float32)
    for s in range(s_len):                 # S is small & static -> unrolled
        counts = counts + jnp.where(ids[:, s:s + 1] == vocab_iota, 1.0, 0.0)

    pooled_sum = jnp.dot(counts.astype(emb_ref.dtype), emb_ref[...],
                         preferred_element_type=jnp.float32)       # (TB, E)
    pooled = pooled_sum * inv_den          # masked mean

    # fc1 + ReLU (bf16 MXU, f32 accumulate)
    h = jnp.dot(pooled.astype(w1_ref.dtype), w1_ref[...],
                preferred_element_type=jnp.float32) + b1_ref[...]  # (TB, H)
    h = jnp.maximum(h, 0.0)

    # fc2 (N padded to 128 -> lane-dense store)
    logits = jnp.dot(h.astype(w2_ref.dtype), w2_ref[...],
                     preferred_element_type=jnp.float32) + b2_ref[...]
    out_ref[...] = logits                  # (TB, C_pad)


def mlp_classifier_forward(input_ids, attention_mask, params, *,
                           batch_tile=128):
    """input_ids: (B, S) int32, attention_mask: (B, S) {0,1}."""
    emb = params["embedding"]              # (V, E) bf16, row 0 == 0 (padding_idx)
    w1, b1 = params["w1"], params["b1"]    # (E, H) bf16, (1, H) f32
    w2, b2 = params["w2"], params["b2"]    # (H, C) bf16, (1, C) f32

    B, S = input_ids.shape
    V, E = emb.shape
    H = w1.shape[1]
    C = w2.shape[1]
    C_pad = _round_up(C, 128)

    mask = attention_mask.astype(jnp.float32)
    # Invariant required by the fused gather: padded positions carry id 0 and
    # embedding row 0 is zero, so they add nothing to the pooled sum.
    ids = jnp.where(mask > 0, input_ids, 0).astype(jnp.int32)
    denom = jnp.sum(mask, axis=1, keepdims=True)                   # (B, 1)
    inv_denom = 1.0 / denom                                        # exact f32

    # Batch tiling. NOTE(generation tuning): on v5e/v6e (128 MiB VMEM) prefer a
    # larger batch_tile; on v7x (64 MiB VMEM, 2 TCs) use roughly half.
    tb = min(batch_tile, _round_up(B, 8))
    b_pad = _round_up(B, tb)
    if b_pad != B:
        pad = b_pad - B
        ids = jnp.pad(ids, ((0, pad), (0, 0)))
        inv_denom = jnp.pad(inv_denom, ((0, pad), (0, 0)), constant_values=1.0)

    # Pad fc2 N dim to a lane-dense 128 so the output store is unmasked.
    w2p = jnp.pad(w2, ((0, 0), (0, C_pad - C)))
    b2p = jnp.pad(b2, ((0, 0), (0, C_pad - C)))

    grid = (b_pad // tb,)

    flops = 2 * b_pad * (V * E + E * H + H * C_pad)
    bytes_accessed = (ids.size * 4 + inv_denom.size * 4
                      + emb.size * emb.dtype.itemsize
                      + w1.size * w1.dtype.itemsize + b1.size * 4
                      + w2p.size * w2p.dtype.itemsize + b2p.size * 4
                      + b_pad * C_pad * 4)

    out = pl.pallas_call(
        mlp_classifier_kernel,
        out_shape=jax.ShapeDtypeStruct((b_pad, C_pad), jnp.float32),
        grid_spec=pltpu.PrefetchScalarGridSpec(
            num_scalar_prefetch=0,
            grid=grid,
            in_specs=[
                pl.BlockSpec((tb, S), lambda i: (i, 0)),      # token ids tile
                pl.BlockSpec((tb, 1), lambda i: (i, 0)),      # 1/denom tile
                pl.BlockSpec((V, E), lambda i: (0, 0)),       # emb table (resident)
                pl.BlockSpec((E, H), lambda i: (0, 0)),       # w1 (resident)
                pl.BlockSpec((1, H), lambda i: (0, 0)),       # b1
                pl.BlockSpec((H, C_pad), lambda i: (0, 0)),   # w2 (padded)
                pl.BlockSpec((1, C_pad), lambda i: (0, 0)),   # b2 (padded)
            ],
            out_specs=pl.BlockSpec((tb, C_pad), lambda i: (i, 0)),
        ),
        compiler_params=pltpu.CompilerParams(
            dimension_semantics=("parallel",),                # megacore on v7x
            vmem_limit_bytes=32 * 1024 * 1024),
        cost_estimate=pl.CostEstimate(flops=flops, transcendentals=0,
                                      bytes_accessed=bytes_accessed),
    )(ids, inv_denom, emb, w1, b1, w2p, b2p)

    return out[:B, :C]


def init_params(key, vocab_size, embed_dim=128, hidden_dim=256, num_classes=4,
                param_dtype=jnp.bfloat16):
    k_emb, k_w1, k_b1, k_w2, k_b2 = jax.random.split(key, 5)
    embedding = jax.random.normal(k_emb, (vocab_size, embed_dim),
                                  jnp.float32) * 0.02
    embedding = embedding.at[0].set(0.0)        # padding_idx=0 -> zero row
    w1 = jax.random.normal(k_w1, (embed_dim, hidden_dim), jnp.float32) * 0.02
    b1 = jax.random.normal(k_b1, (1, hidden_dim), jnp.float32) * 0.02
    w2 = jax.random.normal(k_w2, (hidden_dim, num_classes), jnp.float32) * 0.02
    b2 = jax.random.normal(k_b2, (1, num_classes), jnp.float32) * 0.02
    return {"embedding": embedding.astype(param_dtype),
            "w1": w1.astype(param_dtype),
            "b1": b1,                            # biases stay f32
            "w2": w2.astype(param_dtype),
            "b2": b2}


def reference_forward(input_ids, attention_mask, params):
    """Plain-JAX reference with the same bf16 parameters / f32 accumulation."""
    mask = attention_mask.astype(jnp.float32)
    embeds = jnp.take(params["embedding"], input_ids,
                      axis=0).astype(jnp.float32)            # (B, S, E)
    pooled = (embeds * mask[:, :, None]).sum(1) / mask.sum(1, keepdims=True)
    h = jnp.dot(pooled.astype(params["w1"].dtype), params["w1"],
                preferred_element_type=jnp.float32) + params["b1"]
    h = jnp.maximum(h, 0.0)
    logits = jnp.dot(h.astype(params["w2"].dtype), params["w2"],
                     preferred_element_type=jnp.float32) + params["b2"]
    return logits


if __name__ == "__main__":
    key = jax.random.PRNGKey(0)
    k_params, k_ids = jax.random.split(key, 2)

    vocab_size = 512
    embed_dim, hidden_dim, num_classes = 128, 256, 4
    B, S = 2, 8

    params = init_params(k_params, vocab_size, embed_dim, hidden_dim,
                         num_classes)

    input_ids = jax.random.randint(k_ids, (B, S), 1, vocab_size,
                                   dtype=jnp.int32)
    # deterministic attention mask: first few tokens valid, rest padded
    lengths = jnp.array([5, 8], dtype=jnp.int32)
    attention_mask = (jnp.arange(S)[None, :] < lengths[:, None]).astype(
        jnp.float32)
    # padded ids -> 0 (as padding_idx would see)
    input_ids = jnp.where(attention_mask > 0, input_ids, 0)

    logits = mlp_classifier_forward(input_ids, attention_mask, params)
    jax.block_until_ready(logits)

    ref = reference_forward(input_ids, attention_mask, params)
    assert logits.shape == (B, num_classes)
    # bf16 params + differing accumulation order -> slightly looser tolerance
    assert jnp.allclose(logits, ref, atol=1e-3, rtol=1e-3), (
        float(jnp.max(jnp.abs(logits - ref))))

    print("KERNEL_OK")
</pallas_src>

<mosaic_0001>
module attributes {stable_mosaic.version = 11 : i64} {
  func.func @mlp_classifier_kernel(%arg0: i32, %arg1: memref<8x8xi32, #tpu.memory_space<vmem>>, %arg2: memref<8x1xf32, #tpu.memory_space<vmem>>, %arg3: memref<512x128xbf16, #tpu.memory_space<vmem>>, %arg4: memref<128x256xbf16, #tpu.memory_space<vmem>>, %arg5: memref<1x256xf32, #tpu.memory_space<vmem>>, %arg6: memref<256x128xbf16, #tpu.memory_space<vmem>>, %arg7: memref<1x128xf32, #tpu.memory_space<vmem>>, %arg8: memref<8x128xf32, #tpu.memory_space<vmem>>) attributes {dimension_semantics = [#tpu.dimension_semantics<parallel>], iteration_bounds = array<i64: 1>, scalar_prefetch = 0 : i64, scratch_operands = 0 : i64, tpu.core_type = #tpu.core_type<tc>, window_params = [{transform_indices = @transform_0, window_bounds = array<i64: 8, 8>}, {transform_indices = @transform_1, window_bounds = array<i64: 8, 1>}, {pipeline_mode = #tpu.pipeline_mode<synchronous>, transform_indices = @transform_2, window_bounds = array<i64: 512, 128>}, {pipeline_mode = #tpu.pipeline_mode<synchronous>, transform_indices = @transform_3, window_bounds = array<i64: 128, 256>}, {pipeline_mode = #tpu.pipeline_mode<synchronous>, transform_indices = @transform_4, window_bounds = array<i64: 1, 256>}, {pipeline_mode = #tpu.pipeline_mode<synchronous>, transform_indices = @transform_5, window_bounds = array<i64: 256, 128>}, {pipeline_mode = #tpu.pipeline_mode<synchronous>, transform_indices = @transform_6, window_bounds = array<i64: 1, 128>}, {transform_indices = @transform_7, window_bounds = array<i64: 8, 128>}]} {
    %c0 = arith.constant 0 : index
    %c0_0 = arith.constant 0 : index
    %0 = vector.load %arg1[%c0, %c0_0] : memref<8x8xi32, #tpu.memory_space<vmem>>, vector<8x8xi32>
    %c0_1 = arith.constant 0 : index
    %c0_2 = arith.constant 0 : index
    %1 = vector.load %arg2[%c0_1, %c0_2] : memref<8x1xf32, #tpu.memory_space<vmem>>, vector<8x1xf32>
    %2 = tpu.iota {dimensions = array<i32: 1>} : vector<8x512xi32>
    %cst = arith.constant 0.000000e+00 : f32
    %3 = vector.broadcast %cst : f32 to vector<8x512xf32>
    %4 = vector.extract_strided_slice %0 {offsets = [0, 0], sizes = [8, 1], strides = [1, 1]} : vector<8x8xi32> to vector<8x1xi32>
    %5 = vector.broadcast %4 : vector<8x1xi32> to vector<8x512xi32>
    %6 = arith.cmpi eq, %5, %2 : vector<8x512xi32>
    %cst_3 = arith.constant 1.000000e+00 : f32
    %cst_4 = arith.constant 0.000000e+00 : f32
    %7 = vector.broadcast %cst_3 : f32 to vector<8x512xf32>
    %8 = vector.broadcast %cst_4 : f32 to vector<8x512xf32>
    %9 = arith.select %6, %7, %8 : vector<8x512xi1>, vector<8x512xf32>
    %10 = arith.addf %3, %9 : vector<8x512xf32>
    %11 = vector.extract_strided_slice %0 {offsets = [0, 1], sizes = [8, 1], strides = [1, 1]} : vector<8x8xi32> to vector<8x1xi32>
    %12 = vector.broadcast %11 : vector<8x1xi32> to vector<8x512xi32>
    %13 = arith.cmpi eq, %12, %2 : vector<8x512xi32>
    %cst_5 = arith.constant 1.000000e+00 : f32
    %cst_6 = arith.constant 0.000000e+00 : f32
    %14 = vector.broadcast %cst_5 : f32 to vector<8x512xf32>
    %15 = vector.broadcast %cst_6 : f32 to vector<8x512xf32>
    %16 = arith.select %13, %14, %15 : vector<8x512xi1>, vector<8x512xf32>
    %17 = arith.addf %10, %16 : vector<8x512xf32>
    %18 = vector.extract_strided_slice %0 {offsets = [0, 2], sizes = [8, 1], strides = [1, 1]} : vector<8x8xi32> to vector<8x1xi32>
    %19 = vector.broadcast %18 : vector<8x1xi32> to vector<8x512xi32>
    %20 = arith.cmpi eq, %19, %2 : vector<8x512xi32>
    %cst_7 = arith.constant 1.000000e+00 : f32
    %cst_8 = arith.constant 0.000000e+00 : f32
    %21 = vector.broadcast %cst_7 : f32 to vector<8x512xf32>
    %22 = vector.broadcast %cst_8 : f32 to vector<8x512xf32>
    %23 = arith.select %20, %21, %22 : vector<8x512xi1>, vector<8x512xf32>
    %24 = arith.addf %17, %23 : vector<8x512xf32>
    %25 = vector.extract_strided_slice %0 {offsets = [0, 3], sizes = [8, 1], strides = [1, 1]} : vector<8x8xi32> to vector<8x1xi32>
    %26 = vector.broadcast %25 : vector<8x1xi32> to vector<8x512xi32>
    %27 = arith.cmpi eq, %26, %2 : vector<8x512xi32>
    %cst_9 = arith.constant 1.000000e+00 : f32
    %cst_10 = arith.constant 0.000000e+00 : f32
    %28 = vector.broadcast %cst_9 : f32 to vector<8x512xf32>
    %29 = vector.broadcast %cst_10 : f32 to vector<8x512xf32>
    %30 = arith.select %27, %28, %29 : vector<8x512xi1>, vector<8x512xf32>
    %31 = arith.addf %24, %30 : vector<8x512xf32>
    %32 = vector.extract_strided_slice %0 {offsets = [0, 4], sizes = [8, 1], strides = [1, 1]} : vector<8x8xi32> to vector<8x1xi32>
    %33 = vector.broadcast %32 : vector<8x1xi32> to vector<8x512xi32>
    %34 = arith.cmpi eq, %33, %2 : vector<8x512xi32>
    %cst_11 = arith.constant 1.000000e+00 : f32
    %cst_12 = arith.constant 0.000000e+00 : f32
    %35 = vector.broadcast %cst_11 : f32 to vector<8x512xf32>
    %36 = vector.broadcast %cst_12 : f32 to vector<8x512xf32>
    %37 = arith.select %34, %35, %36 : vector<8x512xi1>, vector<8x512xf32>
    %38 = arith.addf %31, %37 : vector<8x512xf32>
    %39 = vector.extract_strided_slice %0 {offsets = [0, 5], sizes = [8, 1], strides = [1, 1]} : vector<8x8xi32> to vector<8x1xi32>
    %40 = vector.broadcast %39 : vector<8x1xi32> to vector<8x512xi32>
    %41 = arith.cmpi eq, %40, %2 : vector<8x512xi32>
    %cst_13 = arith.constant 1.000000e+00 : f32
    %cst_14 = arith.constant 0.000000e+00 : f32
    %42 = vector.broadcast %cst_13 : f32 to vector<8x512xf32>
    %43 = vector.broadcast %cst_14 : f32 to vector<8x512xf32>
    %44 = arith.select %41, %42, %43 : vector<8x512xi1>, vector<8x512xf32>
    %45 = arith.addf %38, %44 : vector<8x512xf32>
    %46 = vector.extract_strided_slice %0 {offsets = [0, 6], sizes = [8, 1], strides = [1, 1]} : vector<8x8xi32> to vector<8x1xi32>
    %47 = vector.broadcast %46 : vector<8x1xi32> to vector<8x512xi32>
    %48 = arith.cmpi eq, %47, %2 : vector<8x512xi32>
    %cst_15 = arith.constant 1.000000e+00 : f32
    %cst_16 = arith.constant 0.000000e+00 : f32
    %49 = vector.broadcast %cst_15 : f32 to vector<8x512xf32>
    %50 = vector.broadcast %cst_16 : f32 to vector<8x512xf32>
    %51 = arith.select %48, %49, %50 : vector<8x512xi1>, vector<8x512xf32>
    %52 = arith.addf %45, %51 : vector<8x512xf32>
    %53 = vector.extract_strided_slice %0 {offsets = [0, 7], sizes = [8, 1], strides = [1, 1]} : vector<8x8xi32> to vector<8x1xi32>
    %54 = vector.broadcast %53 : vector<8x1xi32> to vector<8x512xi32>
    %55 = arith.cmpi eq, %54, %2 : vector<8x512xi32>
    %cst_17 = arith.constant 1.000000e+00 : f32
    %cst_18 = arith.constant 0.000000e+00 : f32
    %56 = vector.broadcast %cst_17 : f32 to vector<8x512xf32>
    %57 = vector.broadcast %cst_18 : f32 to vector<8x512xf32>
    %58 = arith.select %55, %56, %57 : vector<8x512xi1>, vector<8x512xf32>
    %59 = arith.addf %52, %58 : vector<8x512xf32>
    %60 = arith.truncf %59 : vector<8x512xf32> to vector<8x512xbf16>
    %c0_19 = arith.constant 0 : index
    %c0_20 = arith.constant 0 : index
    %61 = vector.load %arg3[%c0_19, %c0_20] : memref<512x128xbf16, #tpu.memory_space<vmem>>, vector<512x128xbf16>
    %cst_21 = arith.constant dense<0.000000e+00> : vector<8x128xf32>
    %62 = tpu.matmul %60, %61, %cst_21 {dimension_numbers = #tpu.dot_dimension_numbers<[1], [0], [0], [1], [0, 0, 1, 1], [], []>} : vector<8x512xbf16>, vector<512x128xbf16>, vector<8x128xf32> -> vector<8x128xf32>
    %63 = vector.broadcast %1 : vector<8x1xf32> to vector<8x128xf32>
    %64 = arith.mulf %62, %63 : vector<8x128xf32>
    %65 = arith.truncf %64 : vector<8x128xf32> to vector<8x128xbf16>
    %c0_22 = arith.constant 0 : index
    %c0_23 = arith.constant 0 : index
    %66 = vector.load %arg4[%c0_22, %c0_23] : memref<128x256xbf16, #tpu.memory_space<vmem>>, vector<128x256xbf16>
    %cst_24 = arith.constant dense<0.000000e+00> : vector<8x256xf32>
    %67 = tpu.matmul %65, %66, %cst_24 {dimension_numbers = #tpu.dot_dimension_numbers<[1], [0], [0], [1], [0, 0, 1, 1], [], []>} : vector<8x128xbf16>, vector<128x256xbf16>, vector<8x256xf32> -> vector<8x256xf32>
    %c0_25 = arith.constant 0 : index
    %c0_26 = arith.constant 0 : index
    %68 = vector.load %arg5[%c0_25, %c0_26] : memref<1x256xf32, #tpu.memory_space<vmem>>, vector<1x256xf32>
    %69 = vector.broadcast %68 : vector<1x256xf32> to vector<8x256xf32>
    %70 = arith.addf %67, %69 : vector<8x256xf32>
    %cst_27 = arith.constant 0.000000e+00 : f32
    %71 = vector.broadcast %cst_27 : f32 to vector<8x256xf32>
    %72 = arith.maximumf %70, %71 : vector<8x256xf32>
    %73 = arith.truncf %72 : vector<8x256xf32> to vector<8x256xbf16>
    %c0_28 = arith.constant 0 : index
    %c0_29 = arith.constant 0 : index
    %74 = vector.load %arg6[%c0_28, %c0_29] : memref<256x128xbf16, #tpu.memory_space<vmem>>, vector<256x128xbf16>
    %cst_30 = arith.constant dense<0.000000e+00> : vector<8x128xf32>
    %75 = tpu.matmul %73, %74, %cst_30 {dimension_numbers = #tpu.dot_dimension_numbers<[1], [0], [0], [1], [0, 0, 1, 1], [], []>} : vector<8x256xbf16>, vector<256x128xbf16>, vector<8x128xf32> -> vector<8x128xf32>
    %c0_31 = arith.constant 0 : index
    %c0_32 = arith.constant 0 : index
    %76 = vector.load %arg7[%c0_31, %c0_32] : memref<1x128xf32, #tpu.memory_space<vmem>>, vector<1x128xf32>
    %77 = vector.broadcast %76 : vector<1x128xf32> to vector<8x128xf32>
    %78 = arith.addf %75, %77 : vector<8x128xf32>
    %c0_33 = arith.constant 0 : index
    %c0_34 = arith.constant 0 : index
    %79 = vector.load %arg8[%c0_33, %c0_34] : memref<8x128xf32, #tpu.memory_space<vmem>>, vector<8x128xf32>
    tpu.vector_store %arg8[%c0_33, %c0_34], %78 {strides = array<i32>} : memref<8x128xf32, #tpu.memory_space<vmem>>, vector<8x128xf32>,
    return
  }
  func.func @transform_0(%arg0: i32) -> (i32, i32) {
    %c0_i32 = arith.constant 0 : i32
    %c0_i32_0 = arith.constant 0 : i32
    return %arg0, %c0_i32 : i32, i32
  }
  func.func @transform_1(%arg0: i32) -> (i32, i32) {
    %c0_i32 = arith.constant 0 : i32
    %c0_i32_0 = arith.constant 0 : i32
    return %arg0, %c0_i32 : i32, i32
  }
  func.func @transform_2(%arg0: i32) -> (i32, i32) {
    %c0_i32 = arith.constant 0 : i32
    %c0_i32_0 = arith.constant 0 : i32
    %c0_i32_1 = arith.constant 0 : i32
    return %c0_i32, %c0_i32_0 : i32, i32
  }
  func.func @transform_3(%arg0: i32) -> (i32, i32) {
    %c0_i32 = arith.constant 0 : i32
    %c0_i32_0 = arith.constant 0 : i32
    %c0_i32_1 = arith.constant 0 : i32
    return %c0_i32, %c0_i32_0 : i32, i32
  }
  func.func @transform_4(%arg0: i32) -> (i32, i32) {
    %c0_i32 = arith.constant 0 : i32
    %c0_i32_0 = arith.constant 0 : i32
    %c0_i32_1 = arith.constant 0 : i32
    return %c0_i32, %c0_i32_0 : i32, i32
  }
  func.func @transform_5(%arg0: i32) -> (i32, i32) {
    %c0_i32 = arith.constant 0 : i32
    %c0_i32_0 = arith.constant 0 : i32
    %c0_i32_1 = arith.constant 0 : i32
    return %c0_i32, %c0_i32_0 : i32, i32
  }
  func.func @transform_6(%arg0: i32) -> (i32, i32) {
    %c0_i32 = arith.constant 0 : i32
    %c0_i32_0 = arith.constant 0 : i32
    %c0_i32_1 = arith.constant 0 : i32
    return %c0_i32, %c0_i32_0 : i32, i32
  }
  func.func @transform_7(%arg0: i32) -> (i32, i32) {
    %c0_i32 = arith.constant 0 : i32
    %c0_i32_0 = arith.constant 0 : i32
    return %arg0, %c0_i32 : i32, i32
  }
}

</mosaic_0001>

<llo_original>
// kernel: tpu_custom_call.1
$region0: #{tpu_custom_call.1}
  #allocation0 [shape = 'u32[]', space=smem, size = 0x4, offset = 0x4, fixed_abs, tag = 'smem constant byte address 0x4 - core index']
  #allocation1 [shape = 'u32[72,128]{1,0:T(1,128)}', space=vmem, size = 0x9000, scoped, tag = 'internal scratch']
  %s0 = inlined_call_operand.vmem [shape: s32[8,8], index: 0, kind: input, shape index: {}]
  %s1 = inlined_call_operand.vmem [shape: f32[8,1], index: 1, kind: input, shape index: {}]
  %s2 = inlined_call_operand.hbm [shape: bf16[512,128], index: 2, kind: input, shape index: {}]
  %s3 = inlined_call_operand.hbm [shape: bf16[128,256], index: 3, kind: input, shape index: {}]
  %s4 = inlined_call_operand.vmem [shape: f32[1,256], index: 4, kind: input, shape index: {}]
  %s5 = inlined_call_operand.hbm [shape: bf16[256,128], index: 5, kind: input, shape index: {}]
  %s6 = inlined_call_operand.vmem [shape: f32[1,128], index: 6, kind: input, shape index: {}]
  %s7 = inlined_call_operand.hbm [shape: f32[8,128], index: 7, kind: output, shape index: {}]
  %s8 = sld [smem:[#allocation0]]
  $region50: #{tpu_custom_call.1} parent=0
    _
  %s10 = ssub.s32 1, %s8
  %s11 = scalar_select 0, %s10, %s8
  $region1: #{tpu_custom_call.1} parent=0
    #allocation2 [shape = 'u8[131072]{0}', space=vmem, size = 0x20000, scoped, tag = 'input window, operand 2, single buffered']
    #allocation3 [shape = 's32[1]{0}', space=sflag, size = 0x4, scoped, tag = 'scoped memory for tpu_custom_call.1']
    #allocation4 [shape = 's32[1]{0}', space=sflag, size = 0x4, scoped, tag = 'scoped memory for tpu_custom_call.1']
    #allocation5 [shape = 'u8[65536]{0}', space=vmem, size = 0x10000, scoped, tag = 'input window, operand 3, single buffered']
    #allocation6 [shape = 's32[1]{0}', space=sflag, size = 0x4, scoped, tag = 'scoped memory for tpu_custom_call.1']
    #allocation7 [shape = 'u8[65536]{0}', space=vmem, size = 0x10000, scoped, tag = 'input window, operand 5, single buffered']
    #allocation8 [shape = 'u8[4096]{0}', space=vmem, size = 0x1000, scoped, tag = 'output window, operand 0, single buffered']
    %12 = vsyncpa [#allocation3], 0
    %13 = vsyncpa [#allocation6], 0
    %14 = vsyncpa [#allocation4], 0
    // Predicated region
    $region2: #{tpu_custom_call.1} parent=1 // pred_check
      _
    $region3: #{tpu_custom_call.1} parent=1 // pred_check_branch
      %16 = sbr.rel (0) target = $region5
    $region4: #{tpu_custom_call.1} parent=1 // pred_region
      _
    $region5: #{tpu_custom_call.1} parent=1 // pred_fallthru
      _
    // Predicated region
    $region6: #{tpu_custom_call.1} parent=1 // pred_check
      _
    $region7: #{tpu_custom_call.1} parent=1 // pred_check_branch
      %18 = sbr.rel (0) target = $region9
    $region8: #{tpu_custom_call.1} parent=1 // pred_region
      _
    $region9: #{tpu_custom_call.1} parent=1 // pred_fallthru
      _
    // Predicated region
    $region10: #{tpu_custom_call.1} parent=1 // pred_check
      _
    $region11: #{tpu_custom_call.1} parent=1 // pred_check_branch
      %20 = sbr.rel (0) target = $region13
    $region12: #{tpu_custom_call.1} parent=1 // pred_region
      %22 = vsyncadd [#allocation3], 0
      %s23 = sshll.u32 %s2, 4
      %s24 = int_to_ptr.hbm [resolvable:$true] %s23
      %s25 = sshll.u32 [#allocation2], 4
      %s26 = int_to_ptr.vmem [resolvable:$true] %s25
      %31 = dma.hbm_to_vmem [thread:$0]  %s24, 4096, %s26, [#allocation3], 64, 64, 4
    $region13: #{tpu_custom_call.1} parent=1 // pred_fallthru
      _
    // Predicated region
    $region14: #{tpu_custom_call.1} parent=1 // pred_check
      _
    $region15: #{tpu_custom_call.1} parent=1 // pred_check_branch
      %33 = sbr.rel (0) target = $region17
    $region16: #{tpu_custom_call.1} parent=1 // pred_region
      %35 = vsyncadd [#allocation6], 0
      %s36 = sshll.u32 %s3, 4
      %s37 = int_to_ptr.hbm [resolvable:$true] %s36
      %s38 = sshll.u32 [#allocation5], 4
      %s39 = int_to_ptr.vmem [resolvable:$true] %s38
      %44 = dma.hbm_to_vmem [thread:$0]  %s37, 2048, %s39, [#allocation6], 128, 128, 8
    $region17: #{tpu_custom_call.1} parent=1 // pred_fallthru
      _
    // Predicated region
    $region18: #{tpu_custom_call.1} parent=1 // pred_check
      _
    $region19: #{tpu_custom_call.1} parent=1 // pred_check_branch
      %46 = sbr.rel (0) target = $region21
    $region20: #{tpu_custom_call.1} parent=1 // pred_region
      _
    $region21: #{tpu_custom_call.1} parent=1 // pred_fallthru
      _
    // Predicated region
    $region22: #{tpu_custom_call.1} parent=1 // pred_check
      _
    $region23: #{tpu_custom_call.1} parent=1 // pred_check_branch
      %48 = sbr.rel (0) target = $region25
    $region24: #{tpu_custom_call.1} parent=1 // pred_region
      %50 = vsyncadd [#allocation6], 0
      %s51 = sshll.u32 %s5, 4
      %s52 = int_to_ptr.hbm [resolvable:$true] %s51
      %s53 = sshll.u32 [#allocation7], 4
      %s54 = int_to_ptr.vmem [resolvable:$true] %s53
      %59 = dma.hbm_to_vmem [thread:$0]  %s52, 2048, %s54, [#allocation6], 64, 64, 4
    $region25: #{tpu_custom_call.1} parent=1 // pred_fallthru
      _
    // Predicated region
    $region26: #{tpu_custom_call.1} parent=1 // pred_check
      _
    $region27: #{tpu_custom_call.1} parent=1 // pred_check_branch
      %61 = sbr.rel (0) target = $region29
    $region28: #{tpu_custom_call.1} parent=1 // pred_region
      _
    $region29: #{tpu_custom_call.1} parent=1 // pred_fallthru
      _
    // Predicated region
    $region30: #{tpu_custom_call.1} parent=1 // pred_check
      _
    $region31: #{tpu_custom_call.1} parent=1 // pred_check_branch
      %63 = sbr.rel (0) target = $region33
    $region32: #{tpu_custom_call.1} parent=1 // pred_region
      %65 = dma.done [#allocation3], 4096
    $region33: #{tpu_custom_call.1} parent=1 // pred_fallthru
      _
    // Predicated region
    $region34: #{tpu_custom_call.1} parent=1 // pred_check
      _
    $region35: #{tpu_custom_call.1} parent=1 // pred_check_branch
      %67 = sbr.rel (0) target = $region37
    $region36: #{tpu_custom_call.1} parent=1 // pred_region
      %69 = dma.done [#allocation6], 2048
    $region37: #{tpu_custom_call.1} parent=1 // pred_fallthru
      _
    // Predicated region
    $region38: #{tpu_custom_call.1} parent=1 // pred_check
      _
    $region39: #{tpu_custom_call.1} parent=1 // pred_check_branch
      %71 = sbr.rel (0) target = $region41
    $region40: #{tpu_custom_call.1} parent=1 // pred_region
      %73 = dma.done [#allocation6], 2048
    $region41: #{tpu_custom_call.1} parent=1 // pred_fallthru
      _
    %v74 = vld [vmem:[%s0] sm:$0xff]
    %v75 = vld [vmem:[%s1] sm:$0xff]
    %v76 = vlaneseq
    %v77 = vand.u32 %v76, 127
    %v78 = vadd.s32 %v77, 128
    %v79 = vadd.s32 %v77, 256
    %v80 = vadd.s32 %v77, 384
    %81 = vset.pattern.permute.xlu0 0
    %82 = vperm.xlu0 %81, %v74
    %v83 = vpop.permute.xlu0 %82
    %vm84 = vcmp.eq.s32.totalorder %v83, %v77
    %vm85 = vcmp.eq.s32.totalorder %v83, %v78
    %vm86 = vcmp.eq.s32.totalorder %v83, %v79
    %vm87 = vcmp.eq.s32.totalorder %v83, %v80
    %v88 = vsel %vm84, 1.0, 0.0
    %v89 = vsel %vm85, 1.0, 0.0
    %v90 = vsel %vm86, 1.0, 0.0
    %v91 = vsel %vm87, 1.0, 0.0
    %v92 = vadd.f32 %v88, 0.0
    %v93 = vadd.f32 %v89, 0.0
    %v94 = vadd.f32 %v90, 0.0
    %v95 = vadd.f32 %v91, 0.0
    %96 = vset.pattern.permute.xlu0 1
    %97 = vperm.xlu0 %96, %v74
    %v98 = vpop.permute.xlu0 %97
    %vm99 = vcmp.eq.s32.totalorder %v98, %v77
    %vm100 = vcmp.eq.s32.totalorder %v98, %v78
    %vm101 = vcmp.eq.s32.totalorder %v98, %v79
    %vm102 = vcmp.eq.s32.totalorder %v98, %v80
    %v103 = vsel %vm99, 1.0, 0.0
    %v104 = vsel %vm100, 1.0, 0.0
    %v105 = vsel %vm101, 1.0, 0.0
    %v106 = vsel %vm102, 1.0, 0.0
    %v107 = vadd.f32 %v92, %v103
    %v108 = vadd.f32 %v93, %v104
    %v109 = vadd.f32 %v94, %v105
    %v110 = vadd.f32 %v95, %v106
    %111 = vset.pattern.permute.xlu0 2
    %112 = vperm.xlu0 %111, %v74
    %v113 = vpop.permute.xlu0 %112
    %vm114 = vcmp.eq.s32.totalorder %v113, %v77
    %vm115 = vcmp.eq.s32.totalorder %v113, %v78
    %vm116 = vcmp.eq.s32.totalorder %v113, %v79
    %vm117 = vcmp.eq.s32.totalorder %v113, %v80
    %v118 = vsel %vm114, 1.0, 0.0
    %v119 = vsel %vm115, 1.0, 0.0
    %v120 = vsel %vm116, 1.0, 0.0
    %v121 = vsel %vm117, 1.0, 0.0
    %v122 = vadd.f32 %v107, %v118
    %v123 = vadd.f32 %v108, %v119
    %v124 = vadd.f32 %v109, %v120
    %v125 = vadd.f32 %v110, %v121
    %126 = vset.pattern.permute.xlu0 3
    %127 = vperm.xlu0 %126, %v74
    %v128 = vpop.permute.xlu0 %127
    %vm129 = vcmp.eq.s32.totalorder %v128, %v77
    %vm130 = vcmp.eq.s32.totalorder %v128, %v78
    %vm131 = vcmp.eq.s32.totalorder %v128, %v79
    %vm132 = vcmp.eq.s32.totalorder %v128, %v80
    %v133 = vsel %vm129, 1.0, 0.0
    %v134 = vsel %vm130, 1.0, 0.0
    %v135 = vsel %vm131, 1.0, 0.0
    %v136 = vsel %vm132, 1.0, 0.0
    %v137 = vadd.f32 %v122, %v133
    %v138 = vadd.f32 %v123, %v134
    %v139 = vadd.f32 %v124, %v135
    %v140 = vadd.f32 %v125, %v136
    %141 = vset.pattern.permute.xlu0 4
    %142 = vperm.xlu0 %141, %v74
    %v143 = vpop.permute.xlu0 %142
    %vm144 = vcmp.eq.s32.totalorder %v143, %v77
    %vm145 = vcmp.eq.s32.totalorder %v143, %v78
    %vm146 = vcmp.eq.s32.totalorder %v143, %v79
    %vm147 = vcmp.eq.s32.totalorder %v143, %v80
    %v148 = vsel %vm144, 1.0, 0.0
    %v149 = vsel %vm145, 1.0, 0.0
    %v150 = vsel %vm146, 1.0, 0.0
    %v151 = vsel %vm147, 1.0, 0.0
    %v152 = vadd.f32 %v137, %v148
    %v153 = vadd.f32 %v138, %v149
    %v154 = vadd.f32 %v139, %v150
    %v155 = vadd.f32 %v140, %v151
    %156 = vset.pattern.permute.xlu0 5
    %157 = vperm.xlu0 %156, %v74
    %v158 = vpop.permute.xlu0 %157
    %vm159 = vcmp.eq.s32.totalorder %v158, %v77
    %vm160 = vcmp.eq.s32.totalorder %v158, %v78
    %vm161 = vcmp.eq.s32.totalorder %v158, %v79
    %vm162 = vcmp.eq.s32.totalorder %v158, %v80
    %v163 = vsel %vm159, 1.0, 0.0
    %v164 = vsel %vm160, 1.0, 0.0
    %v165 = vsel %vm161, 1.0, 0.0
    %v166 = vsel %vm162, 1.0, 0.0
    %v167 = vadd.f32 %v152, %v163
    %v168 = vadd.f32 %v153, %v164
    %v169 = vadd.f32 %v154, %v165
    %v170 = vadd.f32 %v155, %v166
    %171 = vset.pattern.permute.xlu0 6
    %172 = vperm.xlu0 %171, %v74
    %v173 = vpop.permute.xlu0 %172
    %vm174 = vcmp.eq.s32.totalorder %v173, %v77
    %vm175 = vcmp.eq.s32.totalorder %v173, %v78
    %vm176 = vcmp.eq.s32.totalorder %v173, %v79
    %vm177 = vcmp.eq.s32.totalorder %v173, %v80
    %v178 = vsel %vm174, 1.0, 0.0
    %v179 = vsel %vm175, 1.0, 0.0
    %v180 = vsel %vm176, 1.0, 0.0
    %v181 = vsel %vm177, 1.0, 0.0
    %v182 = vadd.f32 %v167, %v178
    %v183 = vadd.f32 %v168, %v179
    %v184 = vadd.f32 %v169, %v180
    %v185 = vadd.f32 %v170, %v181
    %186 = vset.pattern.permute.xlu0 7
    %187 = vperm.xlu0 %186, %v74
    %v188 = vpop.permute.xlu0 %187
    %vm189 = vcmp.eq.s32.totalorder %v188, %v77
    %vm190 = vcmp.eq.s32.totalorder %v188, %v78
    %vm191 = vcmp.eq.s32.totalorder %v188, %v79
    %vm192 = vcmp.eq.s32.totalorder %v188, %v80
    %v193 = vsel %vm189, 1.0, 0.0
    %v194 = vsel %vm190, 1.0, 0.0
    %v195 = vsel %vm191, 1.0, 0.0
    %v196 = vsel %vm192, 1.0, 0.0
    %v197 = vadd.f32 %v182, %v193
    %v198 = vadd.f32 %v183, %v194
    %v199 = vadd.f32 %v184, %v195
    %v200 = vadd.f32 %v185, %v196
    %v201 = vpack.c.bf16 %v197, %v197
    %v202 = vpack.c.bf16 %v198, %v198
    %v203 = vpack.c.bf16 %v199, %v199
    %v204 = vpack.c.bf16 %v200, %v200
    %v205 = vld [vmem:[#allocation2] sm:$0xf]
    %v206 = vld [vmem:[#allocation2 + $0x4] sm:$0xf]
    %v207 = vld [vmem:[#allocation2 + $0x8] sm:$0xf]
    %v208 = vld [vmem:[#allocation2 + $0xc] sm:$0xf]
    %v209 = vld [vmem:[#allocation2 + $0x10] sm:$0xf]
    %v210 = vld [vmem:[#allocation2 + $0x14] sm:$0xf]
    %v211 = vld [vmem:[#allocation2 + $0x18] sm:$0xf]
    %v212 = vld [vmem:[#allocation2 + $0x1c] sm:$0xf]
    %v213 = vld [vmem:[#allocation2 + $0x20] sm:$0xf]
    %v214 = vld [vmem:[#allocation2 + $0x24] sm:$0xf]
    %v215 = vld [vmem:[#allocation2 + $0x28] sm:$0xf]
    %v216 = vld [vmem:[#allocation2 + $0x2c] sm:$0xf]
    %v217 = vld [vmem:[#allocation2 + $0x30] sm:$0xf]
    %v218 = vld [vmem:[#allocation2 + $0x34] sm:$0xf]
    %v219 = vld [vmem:[#allocation2 + $0x38] sm:$0xf]
    %v220 = vld [vmem:[#allocation2 + $0x3c] sm:$0xf]
    %v221 = vld [vmem:[#allocation2 + $0x40] sm:$0xf]
    %v222 = vld [vmem:[#allocation2 + $0x44] sm:$0xf]
    %v223 = vld [vmem:[#allocation2 + $0x48] sm:$0xf]
    %v224 = vld [vmem:[#allocation2 + $0x4c] sm:$0xf]
    %v225 = vld [vmem:[#allocation2 + $0x50] sm:$0xf]
    %v226 = vld [vmem:[#allocation2 + $0x54] sm:$0xf]
    %v227 = vld [vmem:[#allocation2 + $0x58] sm:$0xf]
    %v228 = vld [vmem:[#allocation2 + $0x5c] sm:$0xf]
    %v229 = vld [vmem:[#allocation2 + $0x60] sm:$0xf]
    %v230 = vld [vmem:[#allocation2 + $0x64] sm:$0xf]
    %v231 = vld [vmem:[#allocation2 + $0x68] sm:$0xf]
    %v232 = vld [vmem:[#allocation2 + $0x6c] sm:$0xf]
    %v233 = vld [vmem:[#allocation2 + $0x70] sm:$0xf]
    %v234 = vld [vmem:[#allocation2 + $0x74] sm:$0xf]
    %v235 = vld [vmem:[#allocation2 + $0x78] sm:$0xf]
    %v236 = vld [vmem:[#allocation2 + $0x7c] sm:$0xf]
    %v237 = vld [vmem:[#allocation2 + $0x80] sm:$0xf]
    %v238 = vld [vmem:[#allocation2 + $0x84] sm:$0xf]
    %v239 = vld [vmem:[#allocation2 + $0x88] sm:$0xf]
    %v240 = vld [vmem:[#allocation2 + $0x8c] sm:$0xf]
    %v241 = vld [vmem:[#allocation2 + $0x90] sm:$0xf]
    %v242 = vld [vmem:[#allocation2 + $0x94] sm:$0xf]
    %v243 = vld [vmem:[#allocation2 + $0x98] sm:$0xf]
    %v244 = vld [vmem:[#allocation2 + $0x9c] sm:$0xf]
    %v245 = vld [vmem:[#allocation2 + $0xa0] sm:$0xf]
    %v246 = vld [vmem:[#allocation2 + $0xa4] sm:$0xf]
    %v247 = vld [vmem:[#allocation2 + $0xa8] sm:$0xf]
    %v248 = vld [vmem:[#allocation2 + $0xac] sm:$0xf]
    %v249 = vld [vmem:[#allocation2 + $0xb0] sm:$0xf]
    %v250 = vld [vmem:[#allocation2 + $0xb4] sm:$0xf]
    %v251 = vld [vmem:[#allocation2 + $0xb8] sm:$0xf]
    %v252 = vld [vmem:[#allocation2 + $0xbc] sm:$0xf]
    %v253 = vld [vmem:[#allocation2 + $0xc0] sm:$0xf]
    %v254 = vld [vmem:[#allocation2 + $0xc4] sm:$0xf]
    %v255 = vld [vmem:[#allocation2 + $0xc8] sm:$0xf]
    %v256 = vld [vmem:[#allocation2 + $0xcc] sm:$0xf]
    %v257 = vld [vmem:[#allocation2 + $0xd0] sm:$0xf]
    %v258 = vld [vmem:[#allocation2 + $0xd4] sm:$0xf]
    %v259 = vld [vmem:[#allocation2 + $0xd8] sm:$0xf]
    %v260 = vld [vmem:[#allocation2 + $0xdc] sm:$0xf]
    %v261 = vld [vmem:[#allocation2 + $0xe0] sm:$0xf]
    %v262 = vld [vmem:[#allocation2 + $0xe4] sm:$0xf]
    %v263 = vld [vmem:[#allocation2 + $0xe8] sm:$0xf]
    %v264 = vld [vmem:[#allocation2 + $0xec] sm:$0xf]
    %v265 = vld [vmem:[#allocation2 + $0xf0] sm:$0xf]
    %v266 = vld [vmem:[#allocation2 + $0xf4] sm:$0xf]
    %v267 = vld [vmem:[#allocation2 + $0xf8] sm:$0xf]
    %v268 = vld [vmem:[#allocation2 + $0xfc] sm:$0xf]
    %v333 = vunpack.c.l.b16 %v205
    %v334 = vunpack.c.l.b16 %v206
    %v335 = vunpack.c.l.b16 %v207
    %v336 = vunpack.c.l.b16 %v208
    %v337 = vunpack.c.l.b16 %v209
    %v338 = vunpack.c.l.b16 %v210
    %v339 = vunpack.c.l.b16 %v211
    %v340 = vunpack.c.l.b16 %v212
    %v341 = vunpack.c.l.b16 %v213
    %v342 = vunpack.c.l.b16 %v214
    %v343 = vunpack.c.l.b16 %v215
    %v344 = vunpack.c.l.b16 %v216
    %v345 = vunpack.c.l.b16 %v217
    %v346 = vunpack.c.l.b16 %v218
    %v347 = vunpack.c.l.b16 %v219
    %v348 = vunpack.c.l.b16 %v220
    %v349 = vunpack.c.l.b16 %v221
    %v350 = vunpack.c.l.b16 %v222
    %v351 = vunpack.c.l.b16 %v223
    %v352 = vunpack.c.l.b16 %v224
    %v353 = vunpack.c.l.b16 %v225
    %v354 = vunpack.c.l.b16 %v226
    %v355 = vunpack.c.l.b16 %v227
    %v356 = vunpack.c.l.b16 %v228
    %v357 = vunpack.c.l.b16 %v229
    %v358 = vunpack.c.l.b16 %v230
    %v359 = vunpack.c.l.b16 %v231
    %v360 = vunpack.c.l.b16 %v232
    %v361 = vunpack.c.l.b16 %v233
    %v362 = vunpack.c.l.b16 %v234
    %v363 = vunpack.c.l.b16 %v235
    %v364 = vunpack.c.l.b16 %v236
    %v365 = vunpack.c.l.b16 %v237
    %v366 = vunpack.c.l.b16 %v238
    %v367 = vunpack.c.l.b16 %v239
    %v368 = vunpack.c.l.b16 %v240
    %v369 = vunpack.c.l.b16 %v241
    %v370 = vunpack.c.l.b16 %v242
    %v371 = vunpack.c.l.b16 %v243
    %v372 = vunpack.c.l.b16 %v244
    %v373 = vunpack.c.l.b16 %v245
    %v374 = vunpack.c.l.b16 %v246
    %v375 = vunpack.c.l.b16 %v247
    %v376 = vunpack.c.l.b16 %v248
    %v377 = vunpack.c.l.b16 %v249
    %v378 = vunpack.c.l.b16 %v250
    %v379 = vunpack.c.l.b16 %v251
    %v380 = vunpack.c.l.b16 %v252
    %v381 = vunpack.c.l.b16 %v253
    %v382 = vunpack.c.l.b16 %v254
    %v383 = vunpack.c.l.b16 %v255
    %v384 = vunpack.c.l.b16 %v256
    %v385 = vunpack.c.l.b16 %v257
    %v386 = vunpack.c.l.b16 %v258
    %v387 = vunpack.c.l.b16 %v259
    %v388 = vunpack.c.l.b16 %v260
    %v389 = vunpack.c.l.b16 %v261
    %v390 = vunpack.c.l.b16 %v262
    %v391 = vunpack.c.l.b16 %v263
    %v392 = vunpack.c.l.b16 %v264
    %v393 = vunpack.c.l.b16 %v265
    %v394 = vunpack.c.l.b16 %v266
    %v395 = vunpack.c.l.b16 %v267
    %v396 = vunpack.c.l.b16 %v268
    %v397 = vpack.c.b16 %v334, %v333
    %v398 = vpack.c.b16 %v336, %v335
    %v399 = vpack.c.b16 %v338, %v337
    %v400 = vpack.c.b16 %v340, %v339
    %v401 = vpack.c.b16 %v342, %v341
    %v402 = vpack.c.b16 %v344, %v343
    %v403 = vpack.c.b16 %v346, %v345
    %v404 = vpack.c.b16 %v348, %v347
    %v405 = vpack.c.b16 %v350, %v349
    %v406 = vpack.c.b16 %v352, %v351
    %v407 = vpack.c.b16 %v354, %v353
    %v408 = vpack.c.b16 %v356, %v355
    %v409 = vpack.c.b16 %v358, %v357
    %v410 = vpack.c.b16 %v360, %v359
    %v411 = vpack.c.b16 %v362, %v361
    %v412 = vpack.c.b16 %v364, %v363
    %v413 = vpack.c.b16 %v366, %v365
    %v414 = vpack.c.b16 %v368, %v367
    %v415 = vpack.c.b16 %v370, %v369
    %v416 = vpack.c.b16 %v372, %v371
    %v417 = vpack.c.b16 %v374, %v373
    %v418 = vpack.c.b16 %v376, %v375
    %v419 = vpack.c.b16 %v378, %v377
    %v420 = vpack.c.b16 %v380, %v379
    %v421 = vpack.c.b16 %v382, %v381
    %v422 = vpack.c.b16 %v384, %v383
    %v423 = vpack.c.b16 %v386, %v385
    %v424 = vpack.c.b16 %v388, %v387
    %v425 = vpack.c.b16 %v390, %v389
    %v426 = vpack.c.b16 %v392, %v391
    %v427 = vpack.c.b16 %v394, %v393
    %v428 = vpack.c.b16 %v396, %v395
    %461 = vmatpush.bf16.msra.mxu0 %v404
    %462 = vmatpush.bf16.msra.mxu0 %v403
    %463 = vmatpush.bf16.msra.mxu0 %v402
    %464 = vmatpush.bf16.msra.mxu0 %v401
    %465 = vmatpush.bf16.msra.mxu0 %v400
    %466 = vmatpush.bf16.msra.mxu0 %v399
    %467 = vmatpush.bf16.msra.mxu0 %v398
    %468 = vmatpush.bf16.msra.mxu0 %v397
    %469 = vmatmul.bf16.gmra.mxu0 %v201
    %v470 = vpop.f32.mrf.mxu0
    %v471 = vadd.f32 0.0, %v470
    %v472 = vpop.f32.mrf.mxu0
    %473 = vdwg.mxu0
    %474 = vmatpush.bf16.msra.mxu0 %v412
    %475 = vmatpush.bf16.msra.mxu0 %v411
    %476 = vmatpush.bf16.msra.mxu0 %v410
    %477 = vmatpush.bf16.msra.mxu0 %v409
    %478 = vmatpush.bf16.msra.mxu0 %v408
    %479 = vmatpush.bf16.msra.mxu0 %v407
    %480 = vmatpush.bf16.msra.mxu0 %v406
    %481 = vmatpush.bf16.msra.mxu0 %v405
    %482 = vmatmul.bf16.gmra.mxu0 %v202
    %v483 = vpop.f32.mrf.mxu0
    %v484 = vadd.f32 %v471, %v483
    %v485 = vpop.f32.mrf.mxu0
    %486 = vdwg.mxu0
    %487 = vmatpush.bf16.msra.mxu0 %v420
    %488 = vmatpush.bf16.msra.mxu0 %v419
    %489 = vmatpush.bf16.msra.mxu0 %v418
    %490 = vmatpush.bf16.msra.mxu0 %v417
    %491 = vmatpush.bf16.msra.mxu0 %v416
    %492 = vmatpush.bf16.msra.mxu0 %v415
    %493 = vmatpush.bf16.msra.mxu0 %v414
    %494 = vmatpush.bf16.msra.mxu0 %v413
    %495 = vmatmul.bf16.gmra.mxu0 %v203
    %v496 = vpop.f32.mrf.mxu0
    %v497 = vadd.f32 %v484, %v496
    %v498 = vpop.f32.mrf.mxu0
    %499 = vdwg.mxu0
    %500 = vmatpush.bf16.msra.mxu0 %v428
    %501 = vmatpush.bf16.msra.mxu0 %v427
    %502 = vmatpush.bf16.msra.mxu0 %v426
    %503 = vmatpush.bf16.msra.mxu0 %v425
    %504 = vmatpush.bf16.msra.mxu0 %v424
    %505 = vmatpush.bf16.msra.mxu0 %v423
    %506 = vmatpush.bf16.msra.mxu0 %v422
    %507 = vmatpush.bf16.msra.mxu0 %v421
    %508 = vmatmul.bf16.gmra.mxu0 %v204
    %v509 = vpop.f32.mrf.mxu0
    %v510 = vadd.f32 %v497, %v509
    %v511 = vpop.f32.mrf.mxu0
    %512 = vdwg.mxu0
    %514 = vset.pattern.permute.xlu0 0
    %515 = vperm.xlu0 %514, %v75
    %v516 = vpop.permute.xlu0 %515
    %v518 = vmul.f32 %v510, %v516
    %v519 = vpack.c.bf16 %v518, %v518
    %v520 = vld [vmem:[#allocation5] sm:$0xff]
    %v521 = vld [vmem:[#allocation5 + $0x8] sm:$0xff]
    %v522 = vld [vmem:[#allocation5 + $0x10] sm:$0xff]
    %v523 = vld [vmem:[#allocation5 + $0x18] sm:$0xff]
    %v524 = vld [vmem:[#allocation5 + $0x20] sm:$0xff]
    %v525 = vld [vmem:[#allocation5 + $0x28] sm:$0xff]
    %v526 = vld [vmem:[#allocation5 + $0x30] sm:$0xff]
    %v527 = vld [vmem:[#allocation5 + $0x38] sm:$0xff]
    %v528 = vld [vmem:[#allocation5 + $0x40] sm:$0xff]
    %v529 = vld [vmem:[#allocation5 + $0x48] sm:$0xff]
    %v530 = vld [vmem:[#allocation5 + $0x50] sm:$0xff]
    %v531 = vld [vmem:[#allocation5 + $0x58] sm:$0xff]
    %v532 = vld [vmem:[#allocation5 + $0x60] sm:$0xff]
    %v533 = vld [vmem:[#allocation5 + $0x68] sm:$0xff]
    %v534 = vld [vmem:[#allocation5 + $0x70] sm:$0xff]
    %v535 = vld [vmem:[#allocation5 + $0x78] sm:$0xff]
    %v536 = vld [vmem:[%s4] sm:$0x3]
    %v538 = vperm.slane %v536, 0
    %v539 = vperm.slane %v536, 1
    %v558 = vunpack.c.l.b16 %v520
    %v559 = vunpack.c.h.b16 %v520
    %v560 = vunpack.c.l.b16 %v521
    %v561 = vunpack.c.h.b16 %v521
    %v562 = vunpack.c.l.b16 %v522
    %v563 = vunpack.c.h.b16 %v522
    %v564 = vunpack.c.l.b16 %v523
    %v565 = vunpack.c.h.b16 %v523
    %v566 = vunpack.c.l.b16 %v524
    %v567 = vunpack.c.h.b16 %v524
    %v568 = vunpack.c.l.b16 %v525
    %v569 = vunpack.c.h.b16 %v525
    %v570 = vunpack.c.l.b16 %v526
    %v571 = vunpack.c.h.b16 %v526
    %v572 = vunpack.c.l.b16 %v527
    %v573 = vunpack.c.h.b16 %v527
    %v574 = vunpack.c.l.b16 %v528
    %v575 = vunpack.c.h.b16 %v528
    %v576 = vunpack.c.l.b16 %v529
    %v577 = vunpack.c.h.b16 %v529
    %v578 = vunpack.c.l.b16 %v530
    %v579 = vunpack.c.h.b16 %v530
    %v580 = vunpack.c.l.b16 %v531
    %v581 = vunpack.c.h.b16 %v531
    %v582 = vunpack.c.l.b16 %v532
    %v583 = vunpack.c.h.b16 %v532
    %v584 = vunpack.c.l.b16 %v533
    %v585 = vunpack.c.h.b16 %v533
    %v586 = vunpack.c.l.b16 %v534
    %v587 = vunpack.c.h.b16 %v534
    %v588 = vunpack.c.l.b16 %v535
    %v589 = vunpack.c.h.b16 %v535
    %v590 = vpack.c.b16 %v560, %v558
    %v591 = vpack.c.b16 %v561, %v559
    %v592 = vpack.c.b16 %v564, %v562
    %v593 = vpack.c.b16 %v565, %v563
    %v594 = vpack.c.b16 %v568, %v566
    %v595 = vpack.c.b16 %v569, %v567
    %v596 = vpack.c.b16 %v572, %v570
    %v597 = vpack.c.b16 %v573, %v571
    %v598 = vpack.c.b16 %v576, %v574
    %v599 = vpack.c.b16 %v577, %v575
    %v600 = vpack.c.b16 %v580, %v578
    %v601 = vpack.c.b16 %v581, %v579
    %v602 = vpack.c.b16 %v584, %v582
    %v603 = vpack.c.b16 %v585, %v583
    %v604 = vpack.c.b16 %v588, %v586
    %v605 = vpack.c.b16 %v589, %v587
    %622 = vmatpush.bf16.msra.mxu0 %v604
    %623 = vmatpush.bf16.msra.mxu0 %v602
    %624 = vmatpush.bf16.msra.mxu0 %v600
    %625 = vmatpush.bf16.msra.mxu0 %v598
    %626 = vmatpush.bf16.msra.mxu0 %v596
    %627 = vmatpush.bf16.msra.mxu0 %v594
    %628 = vmatpush.bf16.msra.mxu0 %v592
    %629 = vmatpush.bf16.msra.mxu0 %v590
    %630 = vmatmul.bf16.gmra.mxu0 %v519
    %v631 = vpop.f32.mrf.mxu0
    %v632 = vadd.f32 %v538, %v631
    %v633 = vpop.f32.mrf.mxu0
    %634 = vdwg.mxu0
    %635 = vmatpush.bf16.msra.mxu0 %v605
    %636 = vmatpush.bf16.msra.mxu0 %v603
    %637 = vmatpush.bf16.msra.mxu0 %v601
    %638 = vmatpush.bf16.msra.mxu0 %v599
    %639 = vmatpush.bf16.msra.mxu0 %v597
    %640 = vmatpush.bf16.msra.mxu0 %v595
    %641 = vmatpush.bf16.msra.mxu0 %v593
    %642 = vmatpush.bf16.msra.mxu0 %v591
    %643 = vmatmul.bf16.gmra.mxu0 %v519
    %v644 = vpop.f32.mrf.mxu0
    %v645 = vadd.f32 %v539, %v644
    %v646 = vpop.f32.mrf.mxu0
    %647 = vdwg.mxu0
    %v648 = vmax.f32 %v632, 0.0
    %v649 = vmax.f32 %v645, 0.0
    %v650 = vpack.c.bf16 %v648, %v648
    %v651 = vpack.c.bf16 %v649, %v649
    %v652 = vld [vmem:[#allocation7] sm:$0xf]
    %v653 = vld [vmem:[#allocation7 + $0x4] sm:$0xf]
    %v654 = vld [vmem:[#allocation7 + $0x8] sm:$0xf]
    %v655 = vld [vmem:[#allocation7 + $0xc] sm:$0xf]
    %v656 = vld [vmem:[#allocation7 + $0x10] sm:$0xf]
    %v657 = vld [vmem:[#allocation7 + $0x14] sm:$0xf]
    %v658 = vld [vmem:[#allocation7 + $0x18] sm:$0xf]
    %v659 = vld [vmem:[#allocation7 + $0x1c] sm:$0xf]
    %v660 = vld [vmem:[#allocation7 + $0x20] sm:$0xf]
    %v661 = vld [vmem:[#allocation7 + $0x24] sm:$0xf]
    %v662 = vld [vmem:[#allocation7 + $0x28] sm:$0xf]
    %v663 = vld [vmem:[#allocation7 + $0x2c] sm:$0xf]
    %v664 = vld [vmem:[#allocation7 + $0x30] sm:$0xf]
    %v665 = vld [vmem:[#allocation7 + $0x34] sm:$0xf]
    %v666 = vld [vmem:[#allocation7 + $0x38] sm:$0xf]
    %v667 = vld [vmem:[#allocation7 + $0x3c] sm:$0xf]
    %v668 = vld [vmem:[#allocation7 + $0x40] sm:$0xf]
    %v669 = vld [vmem:[#allocation7 + $0x44] sm:$0xf]
    %v670 = vld [vmem:[#allocation7 + $0x48] sm:$0xf]
    %v671 = vld [vmem:[#allocation7 + $0x4c] sm:$0xf]
    %v672 = vld [vmem:[#allocation7 + $0x50] sm:$0xf]
    %v673 = vld [vmem:[#allocation7 + $0x54] sm:$0xf]
    %v674 = vld [vmem:[#allocation7 + $0x58] sm:$0xf]
    %v675 = vld [vmem:[#allocation7 + $0x5c] sm:$0xf]
    %v676 = vld [vmem:[#allocation7 + $0x60] sm:$0xf]
    %v677 = vld [vmem:[#allocation7 + $0x64] sm:$0xf]
    %v678 = vld [vmem:[#allocation7 + $0x68] sm:$0xf]
    %v679 = vld [vmem:[#allocation7 + $0x6c] sm:$0xf]
    %v680 = vld [vmem:[#allocation7 + $0x70] sm:$0xf]
    %v681 = vld [vmem:[#allocation7 + $0x74] sm:$0xf]
    %v682 = vld [vmem:[#allocation7 + $0x78] sm:$0xf]
    %v683 = vld [vmem:[#allocation7 + $0x7c] sm:$0xf]
    %v684 = vld [vmem:[%s6] sm:$0x1]
    %v686 = vperm.slane %v684, 0
    %v720 = vunpack.c.l.b16 %v652
    %v721 = vunpack.c.l.b16 %v653
    %v722 = vunpack.c.l.b16 %v654
    %v723 = vunpack.c.l.b16 %v655
    %v724 = vunpack.c.l.b16 %v656
    %v725 = vunpack.c.l.b16 %v657
    %v726 = vunpack.c.l.b16 %v658
    %v727 = vunpack.c.l.b16 %v659
    %v728 = vunpack.c.l.b16 %v660
    %v729 = vunpack.c.l.b16 %v661
    %v730 = vunpack.c.l.b16 %v662
    %v731 = vunpack.c.l.b16 %v663
    %v732 = vunpack.c.l.b16 %v664
    %v733 = vunpack.c.l.b16 %v665
    %v734 = vunpack.c.l.b16 %v666
    %v735 = vunpack.c.l.b16 %v667
    %v736 = vunpack.c.l.b16 %v668
    %v737 = vunpack.c.l.b16 %v669
    %v738 = vunpack.c.l.b16 %v670
    %v739 = vunpack.c.l.b16 %v671
    %v740 = vunpack.c.l.b16 %v672
    %v741 = vunpack.c.l.b16 %v673
    %v742 = vunpack.c.l.b16 %v674
    %v743 = vunpack.c.l.b16 %v675
    %v744 = vunpack.c.l.b16 %v676
    %v745 = vunpack.c.l.b16 %v677
    %v746 = vunpack.c.l.b16 %v678
    %v747 = vunpack.c.l.b16 %v679
    %v748 = vunpack.c.l.b16 %v680
    %v749 = vunpack.c.l.b16 %v681
    %v750 = vunpack.c.l.b16 %v682
    %v751 = vunpack.c.l.b16 %v683
    %v752 = vpack.c.b16 %v721, %v720
    %v753 = vpack.c.b16 %v723, %v722
    %v754 = vpack.c.b16 %v725, %v724
    %v755 = vpack.c.b16 %v727, %v726
    %v756 = vpack.c.b16 %v729, %v728
    %v757 = vpack.c.b16 %v731, %v730
    %v758 = vpack.c.b16 %v733, %v732
    %v759 = vpack.c.b16 %v735, %v734
    %v760 = vpack.c.b16 %v737, %v736
    %v761 = vpack.c.b16 %v739, %v738
    %v762 = vpack.c.b16 %v741, %v740
    %v763 = vpack.c.b16 %v743, %v742
    %v764 = vpack.c.b16 %v745, %v744
    %v765 = vpack.c.b16 %v747, %v746
    %v766 = vpack.c.b16 %v749, %v748
    %v767 = vpack.c.b16 %v751, %v750
    %784 = vmatpush.bf16.msra.mxu0 %v759
    %785 = vmatpush.bf16.msra.mxu0 %v758
    %786 = vmatpush.bf16.msra.mxu0 %v757
    %787 = vmatpush.bf16.msra.mxu0 %v756
    %788 = vmatpush.bf16.msra.mxu0 %v755
    %789 = vmatpush.bf16.msra.mxu0 %v754
    %790 = vmatpush.bf16.msra.mxu0 %v753
    %791 = vmatpush.bf16.msra.mxu0 %v752
    %792 = vmatmul.bf16.gmra.mxu0 %v650
    %v793 = vpop.f32.mrf.mxu0
    %v794 = vadd.f32 %v686, %v793
    %v795 = vpop.f32.mrf.mxu0
    %796 = vdwg.mxu0
    %797 = vmatpush.bf16.msra.mxu0 %v767
    %798 = vmatpush.bf16.msra.mxu0 %v766
    %799 = vmatpush.bf16.msra.mxu0 %v765
    %800 = vmatpush.bf16.msra.mxu0 %v764
    %801 = vmatpush.bf16.msra.mxu0 %v763
    %802 = vmatpush.bf16.msra.mxu0 %v762
    %803 = vmatpush.bf16.msra.mxu0 %v761
    %804 = vmatpush.bf16.msra.mxu0 %v760
    %805 = vmatmul.bf16.gmra.mxu0 %v651
    %v806 = vpop.f32.mrf.mxu0
    %v807 = vadd.f32 %v794, %v806
    %v808 = vpop.f32.mrf.mxu0
    %809 = vdwg.mxu0
    %810 = vst [vmem:[#allocation8] sm:$0xff] %v807
    // Predicated region
    $region42: #{tpu_custom_call.1} parent=1 // pred_check
      _
    $region43: #{tpu_custom_call.1} parent=1 // pred_check_branch
      %812 = sbr.rel (0) target = $region45
    $region44: #{tpu_custom_call.1} parent=1 // pred_region
      %814 = vsyncadd [#allocation4], 0
      %s816 = sshll.u32 [#allocation8], 4
      %s817 = int_to_ptr.vmem [resolvable:$true] %s816
      %s818 = sshll.u32 %s7, 4
      %s819 = int_to_ptr.hbm [resolvable:$true] %s818
      %821 = dma.vmem_to_hbm [thread:$0]  %s817, 128, %s819, [#allocation4]
    $region45: #{tpu_custom_call.1} parent=1 // pred_fallthru
      _
    // Predicated region
    $region46: #{tpu_custom_call.1} parent=1 // pred_check
      _
    $region47: #{tpu_custom_call.1} parent=1 // pred_check_branch
      %823 = sbr.rel (0) target = $region49
    $region48: #{tpu_custom_call.1} parent=1 // pred_region
      %825 = dma.done [#allocation4], 128
    $region49: #{tpu_custom_call.1} parent=1 // pred_fallthru
      _
    %826 = vsyncpa [#allocation3], 1
    %827 = vsyncpa [#allocation6], 1
    %828 = vsyncpa [#allocation4], 1

</llo_original>
